<compile_context>
chip_gen: v5e
topology: v5e:2x2
jax: 0.10.0
libtpu: 0.0.40
codegen_flags: <defaults>
</compile_context>

<pallas_src>
import jax
import jax.numpy as jnp
from jax.experimental import pallas as pl
from jax.experimental.pallas import tpu as pltpu


def _passthrough_kernel(x_ref, o_ref):
    # Output aliases the input (input_output_aliases={0: 0}) and both refs
    # live in HBM (memory_space=pl.ANY), so there is nothing to do: no DMA,
    # no compute. Intentionally empty body.
    del x_ref, o_ref


def print_forward(x, name="print_layer"):
    """JAX/Pallas equivalent of Print.forward: print debug info, return x."""
    # Side-effect part of the module. jax.debug.print fires per invocation
    # (including under jit), matching eager PyTorch print semantics.
    jax.debug.print("debug:" + str(name))
    jax.debug.print(str(tuple(x.shape)))

    if x.size == 0:
        # Nothing to alias / copy for an empty tensor.
        return x

    # Zero-traffic identity: raw HBM refs in and out, output aliased to input,
    # no-op body. The kernel exists only to preserve a pallas_call boundary
    # for the module's forward pass.
    out = pl.pallas_call(
        _passthrough_kernel,
        out_shape=jax.ShapeDtypeStruct(x.shape, x.dtype),
        in_specs=[pl.BlockSpec(memory_space=pl.ANY)],
        out_specs=pl.BlockSpec(memory_space=pl.ANY),
        input_output_aliases={0: 0},
        compiler_params=pltpu.CompilerParams(has_side_effects=True),
        cost_estimate=pl.CostEstimate(
            flops=0, transcendentals=0, bytes_accessed=0
        ),
    )(x)
    return out


if __name__ == "__main__":
    key = jax.random.PRNGKey(0)
    # Small NCHW input consistent with a conv-style debug layer.
    x = jax.random.normal(key, (2, 4, 16, 16), dtype=jnp.float32)

    # Eager call.
    y = print_forward(x, name="my_debug_layer")
    y = jax.block_until_ready(y)
    assert y.shape == x.shape
    assert y.dtype == x.dtype
    # NaN-safe exact identity check.
    assert bool(jnp.array_equal(y, x, equal_nan=True))

    # Also exercise under jit: debug prints fire per call, alias is zero-copy.
    jitted = jax.jit(lambda a: print_forward(a, name="my_debug_layer"))
    y2 = jax.block_until_ready(jitted(x))
    assert bool(jnp.array_equal(y2, x, equal_nan=True))

    print("KERNEL_OK")
</pallas_src>

<mosaic_0001>
module attributes {stable_mosaic.version = 11 : i64} {
  func.func @_passthrough_kernel(%arg0: memref<2x4x16x16xf32, #tpu.memory_space<any>>, %arg1: memref<2x4x16x16xf32, #tpu.memory_space<any>>) attributes {dimension_semantics = [], scalar_prefetch = 0 : i64, scratch_operands = 0 : i64, tpu.core_type = #tpu.core_type<tc>} {
    return
  }
}

</mosaic_0001>

<llo_original>
// kernel: tpu_custom_call.1
$region0: #{tpu_custom_call.1}
  #allocation0 [shape = 'u32[]', space=smem, size = 0x4, offset = 0x4, fixed_abs, tag = 'smem constant byte address 0x4 - core index']
  #allocation1 [shape = 'u32[72,128]{1,0:T(1,128)}', space=vmem, size = 0x9000, scoped, tag = 'internal scratch']
  %s0 = inlined_call_operand.hbm [shape: f32[2,4,16,16], index: 0, kind: input, shape index: {}, may-alias: {0,1}]
  %s1 = inlined_call_operand.hbm [shape: f32[2,4,16,16], index: 1, kind: output, shape index: {}, may-alias: {0,1}]
  %s2 = sld [smem:[#allocation0]]
  $region2: #{tpu_custom_call.1} parent=0
    _
  %s4 = ssub.s32 1, %s2
  %s5 = scalar_select 0, %s4, %s2

</llo_original>
